<compile_context>
chip_gen: v6e
topology: v6e:2x2x1
jax: 0.10.0
libtpu: 0.0.40
codegen_flags: <defaults>
</compile_context>

<pallas_src>
import functools
import math

import jax
import jax.numpy as jnp
from jax.experimental import pallas as pl
from jax.experimental.pallas import tpu as pltpu


def _round_up(x, m):
    return ((x + m - 1) // m) * m


def _cdiv(a, b):
    return (a + b - 1) // b


def _choose_tiling(batch, n_factors, desired_tile_b, biased, budget_bytes):
    """Pick (tile_b, num_tiles, b_pad) for the batch grid.

    VMEM accounting (per pipeline buffer, f32, lane-padded to 128):
      * two (tile_b, F) input tiles        -> 2 * tile_b * F_pad * 4 bytes
      * output (+ bias) (tile_b, 1) tiles  -> (1|2) * tile_b * 128 * 4 bytes
    Everything is double-buffered by the BlockSpec pipeline (x2).
    """
    b_pad128 = _round_up(max(batch, 1), 128)
    f_pad = _round_up(n_factors, 128)                 # lane padding in VMEM
    narrow_cols = 128 * (2 if biased else 1)          # output (+ bias) tiles
    bytes_per_row = 4 * (2 * f_pad + narrow_cols)
    max_tile = budget_bytes // (2 * bytes_per_row)    # x2: double buffering
    max_tile = max(128, (max_tile // 128) * 128)

    tile = _round_up(max(128, min(desired_tile_b, max_tile)), 128)
    tile = min(tile, max_tile)

    num_tiles = _cdiv(b_pad128, tile)
    # Keep >= 2 tiles for non-tiny batches so the "parallel" grid axis can be
    # sharded across both v7x TensorCores (harmless elsewhere).
    if num_tiles == 1 and b_pad128 >= 1024:
        num_tiles = 2
    tile = _round_up(_cdiv(b_pad128, num_tiles), 128)
    b_pad = tile * num_tiles
    return tile, num_tiles, b_pad


def _mf_kernel_biased(u_ref, i_ref, b_ref, out_ref, *, normalize):
    # u_ref / i_ref: (TILE_B, F) — batch on sublanes, factors on lanes.
    prod = u_ref[...] * i_ref[...]                    # VPU elementwise
    pred = jnp.sum(prod, axis=1, keepdims=True)       # (TILE_B, 1) lane reduce (XLU)
    pred = pred + b_ref[...]                          # pre-combined user+item bias
    if normalize:
        pred = jax.nn.sigmoid(pred)
    out_ref[...] = pred


def _mf_kernel(u_ref, i_ref, out_ref, *, normalize):
    prod = u_ref[...] * i_ref[...]
    pred = jnp.sum(prod, axis=1, keepdims=True)
    if normalize:
        pred = jax.nn.sigmoid(pred)
    out_ref[...] = pred


def mf_forward(params, u_idx, i_idx, *, normalize=False, tile_b=4096,
               vmem_buffer_budget_bytes=24 * 1024 * 1024):
    """Pallas equivalent of MatrixFactorization.forward (dim=1 case).

    Returns shape (B,), matching `pred.squeeze()` for a 1-D batch of indices.
    """
    u_emb = params["u_emb"]
    i_emb = params["i_emb"]
    biased = "u_bias" in params
    B = u_idx.shape[0]
    F = u_emb.shape[1]

    u_idx = u_idx.astype(jnp.int32)
    i_idx = i_idx.astype(jnp.int32)

    tile_b, num_tiles, b_pad = _choose_tiling(
        B, F, tile_b, biased, vmem_buffer_budget_bytes)

    pad = b_pad - B
    if pad:
        # Index 0 is always valid; padded rows are computed and sliced away.
        u_idx = jnp.concatenate([u_idx, jnp.zeros((pad,), jnp.int32)])
        i_idx = jnp.concatenate([i_idx, jnp.zeros((pad,), jnp.int32)])

    # Pre-gather embedding rows (wrapper-side).  No transpose: the (b_pad, F)
    # layout is consumed directly by the kernel (lane reduce over F).
    u_g = jnp.take(u_emb, u_idx, axis=0)              # (b_pad, F)
    i_g = jnp.take(i_emb, i_idx, axis=0)              # (b_pad, F)

    operands = [u_g, i_g]
    in_specs = [
        pl.BlockSpec((tile_b, F), lambda b: (b, 0)),
        pl.BlockSpec((tile_b, F), lambda b: (b, 0)),
    ]

    if biased:
        bias = (jnp.take(params["u_bias"][:, 0], u_idx)
                + jnp.take(params["i_bias"][:, 0], i_idx)).reshape(b_pad, 1)
        operands.append(bias)
        in_specs.append(pl.BlockSpec((tile_b, 1), lambda b: (b, 0)))
        kernel = functools.partial(_mf_kernel_biased, normalize=normalize)
    else:
        kernel = functools.partial(_mf_kernel, normalize=normalize)

    out = pl.pallas_call(
        kernel,
        out_shape=jax.ShapeDtypeStruct((b_pad, 1), jnp.float32),
        grid_spec=pltpu.PrefetchScalarGridSpec(
            num_scalar_prefetch=0,
            grid=(num_tiles,),
            in_specs=in_specs,
            out_specs=pl.BlockSpec((tile_b, 1), lambda b: (b, 0)),
        ),
        compiler_params=pltpu.CompilerParams(
            dimension_semantics=("parallel",),        # batch tiles independent
            vmem_limit_bytes=32 * 1024 * 1024,        # safe on v5e/v6e/v7x
        ),
    )(*operands)

    return out[:B, 0]  # pred.squeeze()


def init_params(key, n_users, n_items, n_factors, biased=False):
    """Deterministic synthetic init matching the PyTorch module's __init__."""
    k_u, k_i, k_ub, k_ib = jax.random.split(key, 4)
    # torch.nn.init.xavier_normal_: std = sqrt(2 / (fan_in + fan_out)).
    std_u = math.sqrt(2.0 / (n_users + n_factors))
    std_i = math.sqrt(2.0 / (n_items + n_factors))
    params = {
        "u_emb": jax.random.normal(k_u, (n_users, n_factors), jnp.float32) * std_u,
        "i_emb": jax.random.normal(k_i, (n_items, n_factors), jnp.float32) * std_i,
    }
    if biased:
        # torch.nn.init.normal_: N(0, 1)
        params["u_bias"] = jax.random.normal(k_ub, (n_users, 1), jnp.float32)
        params["i_bias"] = jax.random.normal(k_ib, (n_items, 1), jnp.float32)
    return params


def mf_reference(params, u_idx, i_idx, *, normalize=False):
    """Pure-JAX reference of the PyTorch forward, for verification."""
    u_e = jnp.take(params["u_emb"], u_idx, axis=0)
    i_e = jnp.take(params["i_emb"], i_idx, axis=0)
    pred = jnp.sum(u_e * i_e, axis=1, keepdims=True)
    if "u_bias" in params:
        pred = pred + jnp.take(params["u_bias"], u_idx, axis=0) \
                    + jnp.take(params["i_bias"], i_idx, axis=0)
    pred = jnp.squeeze(pred)
    return jax.nn.sigmoid(pred) if normalize else pred


if __name__ == "__main__":
    n_users, n_items, n_factors = 50, 80, 32
    batch = 8

    key = jax.random.PRNGKey(0)
    k_params, k_u_idx, k_i_idx = jax.random.split(key, 3)

    params = init_params(k_params, n_users, n_items, n_factors, biased=True)
    u_idx = jax.random.randint(k_u_idx, (batch,), 0, n_users, dtype=jnp.int32)
    i_idx = jax.random.randint(k_i_idx, (batch,), 0, n_items, dtype=jnp.int32)

    # Biased model: logits path and sigmoid (predicate) path.
    out_logits = jax.block_until_ready(
        mf_forward(params, u_idx, i_idx, normalize=False))
    out_sigmoid = jax.block_until_ready(
        mf_forward(params, u_idx, i_idx, normalize=True))

    ref_logits = mf_reference(params, u_idx, i_idx, normalize=False)
    ref_sigmoid = mf_reference(params, u_idx, i_idx, normalize=True)

    assert out_logits.shape == (batch,)
    assert jnp.allclose(out_logits, ref_logits, atol=1e-5, rtol=1e-5)
    assert jnp.allclose(out_sigmoid, ref_sigmoid, atol=1e-5, rtol=1e-5)

    # Unbiased model exercises the bias-free kernel variant.
    params_nb = init_params(k_params, n_users, n_items, n_factors, biased=False)
    out_nb = jax.block_until_ready(
        mf_forward(params_nb, u_idx, i_idx, normalize=False))
    ref_nb = mf_reference(params_nb, u_idx, i_idx, normalize=False)
    assert jnp.allclose(out_nb, ref_nb, atol=1e-5, rtol=1e-5)

    # Larger ragged batch exercises the multi-tile grid + 128-padding path.
    batch_big = 1500
    k_ub, k_ib2 = jax.random.split(k_u_idx)
    u_big = jax.random.randint(k_ub, (batch_big,), 0, n_users, dtype=jnp.int32)
    i_big = jax.random.randint(k_ib2, (batch_big,), 0, n_items, dtype=jnp.int32)
    out_big = jax.block_until_ready(
        mf_forward(params, u_big, i_big, normalize=True))
    ref_big = mf_reference(params, u_big, i_big, normalize=True)
    assert out_big.shape == (batch_big,)
    assert jnp.allclose(out_big, ref_big, atol=1e-5, rtol=1e-5)

    print("KERNEL_OK")
</pallas_src>

<mosaic_0001>
module attributes {stable_mosaic.version = 11 : i64} {
  func.func @_mf_kernel_biased(%arg0: i32, %arg1: memref<128x32xf32, #tpu.memory_space<vmem>>, %arg2: memref<128x32xf32, #tpu.memory_space<vmem>>, %arg3: memref<128x1xf32, #tpu.memory_space<vmem>>, %arg4: memref<128x1xf32, #tpu.memory_space<vmem>>) attributes {dimension_semantics = [#tpu.dimension_semantics<parallel>], iteration_bounds = array<i64: 1>, scalar_prefetch = 0 : i64, scratch_operands = 0 : i64, tpu.core_type = #tpu.core_type<tc>, window_params = [{transform_indices = @transform_0, window_bounds = array<i64: 128, 32>}, {transform_indices = @transform_1, window_bounds = array<i64: 128, 32>}, {transform_indices = @transform_2, window_bounds = array<i64: 128, 1>}, {transform_indices = @transform_3, window_bounds = array<i64: 128, 1>}]} {
    %c0 = arith.constant 0 : index
    %c0_0 = arith.constant 0 : index
    %0 = vector.load %arg1[%c0, %c0_0] : memref<128x32xf32, #tpu.memory_space<vmem>>, vector<128x32xf32>
    %c0_1 = arith.constant 0 : index
    %c0_2 = arith.constant 0 : index
    %1 = vector.load %arg2[%c0_1, %c0_2] : memref<128x32xf32, #tpu.memory_space<vmem>>, vector<128x32xf32>
    %2 = arith.mulf %0, %1 : vector<128x32xf32>
    %cst = arith.constant dense<0.000000e+00> : vector<128xf32>
    %3 = vector.multi_reduction <add>, %2, %cst [1] : vector<128x32xf32> to vector<128xf32>
    %4 = vector.shape_cast %3 : vector<128xf32> to vector<128x1xf32>
    %c0_3 = arith.constant 0 : index
    %c0_4 = arith.constant 0 : index
    %5 = vector.load %arg3[%c0_3, %c0_4] : memref<128x1xf32, #tpu.memory_space<vmem>>, vector<128x1xf32>
    %6 = arith.addf %4, %5 : vector<128x1xf32>
    %c0_5 = arith.constant 0 : index
    %c0_6 = arith.constant 0 : index
    %7 = vector.load %arg4[%c0_5, %c0_6] : memref<128x1xf32, #tpu.memory_space<vmem>>, vector<128x1xf32>
    tpu.vector_store %arg4[%c0_5, %c0_6], %6 {strides = array<i32>} : memref<128x1xf32, #tpu.memory_space<vmem>>, vector<128x1xf32>,
    return
  }
  func.func @transform_0(%arg0: i32) -> (i32, i32) {
    %c0_i32 = arith.constant 0 : i32
    %c0_i32_0 = arith.constant 0 : i32
    return %arg0, %c0_i32 : i32, i32
  }
  func.func @transform_1(%arg0: i32) -> (i32, i32) {
    %c0_i32 = arith.constant 0 : i32
    %c0_i32_0 = arith.constant 0 : i32
    return %arg0, %c0_i32 : i32, i32
  }
  func.func @transform_2(%arg0: i32) -> (i32, i32) {
    %c0_i32 = arith.constant 0 : i32
    %c0_i32_0 = arith.constant 0 : i32
    return %arg0, %c0_i32 : i32, i32
  }
  func.func @transform_3(%arg0: i32) -> (i32, i32) {
    %c0_i32 = arith.constant 0 : i32
    %c0_i32_0 = arith.constant 0 : i32
    return %arg0, %c0_i32 : i32, i32
  }
}

</mosaic_0001>

<llo_original>
// kernel: tpu_custom_call.1
$region0: #{tpu_custom_call.1}
  #allocation0 [shape = 'u32[]', space=smem, size = 0x4, offset = 0x4, fixed_abs, tag = 'smem constant byte address 0x4 - core index']
  #allocation1 [shape = 'u32[144,128]{1,0:T(1,128)}', space=vmem, size = 0x12000, scoped, tag = 'internal scratch']
  %s0 = inlined_call_operand.vmem [shape: f32[128,32], index: 0, kind: input, shape index: {}]
  %s1 = inlined_call_operand.vmem [shape: f32[128,32], index: 1, kind: input, shape index: {}]
  %s2 = inlined_call_operand.vmem [shape: f32[128,1], index: 2, kind: input, shape index: {}]
  %s3 = inlined_call_operand.vmem [shape: f32[128,1], index: 3, kind: output, shape index: {}]
  %s4 = sld [smem:[#allocation0]]
  $region22: #{tpu_custom_call.1} parent=0
    _
  %s6 = ssub.s32 1, %s4
  %s7 = scalar_select 0, %s6, %s4
  // Predicated region
  $region2: #{tpu_custom_call.1} parent=0 // pred_check
    _
  $region3: #{tpu_custom_call.1} parent=0 // pred_check_branch
    %9 = sbr.rel (0) target = $region5
  $region4: #{tpu_custom_call.1} parent=0 // pred_region
    _
  $region5: #{tpu_custom_call.1} parent=0 // pred_fallthru
    _
  // Predicated region
  $region6: #{tpu_custom_call.1} parent=0 // pred_check
    _
  $region7: #{tpu_custom_call.1} parent=0 // pred_check_branch
    %11 = sbr.rel (0) target = $region9
  $region8: #{tpu_custom_call.1} parent=0 // pred_region
    _
  $region9: #{tpu_custom_call.1} parent=0 // pred_fallthru
    _
  // Predicated region
  $region10: #{tpu_custom_call.1} parent=0 // pred_check
    _
  $region11: #{tpu_custom_call.1} parent=0 // pred_check_branch
    %13 = sbr.rel (0) target = $region13
  $region12: #{tpu_custom_call.1} parent=0 // pred_region
    _
  $region13: #{tpu_custom_call.1} parent=0 // pred_fallthru
    _
  %v14 = vld [vmem:[%s0] sm:$0xff]
  %v15 = vld [vmem:[%s0 + $0x8] sm:$0xff]
  %v16 = vld [vmem:[%s0 + $0x10] sm:$0xff]
  %v17 = vld [vmem:[%s0 + $0x18] sm:$0xff]
  %v18 = vld [vmem:[%s0 + $0x20] sm:$0xff]
  %v19 = vld [vmem:[%s0 + $0x28] sm:$0xff]
  %v20 = vld [vmem:[%s0 + $0x30] sm:$0xff]
  %v21 = vld [vmem:[%s0 + $0x38] sm:$0xff]
  %v22 = vld [vmem:[%s0 + $0x40] sm:$0xff]
  %v23 = vld [vmem:[%s0 + $0x48] sm:$0xff]
  %v24 = vld [vmem:[%s0 + $0x50] sm:$0xff]
  %v25 = vld [vmem:[%s0 + $0x58] sm:$0xff]
  %v26 = vld [vmem:[%s0 + $0x60] sm:$0xff]
  %v27 = vld [vmem:[%s0 + $0x68] sm:$0xff]
  %v28 = vld [vmem:[%s0 + $0x70] sm:$0xff]
  %v29 = vld [vmem:[%s0 + $0x78] sm:$0xff]
  %v30 = vld [vmem:[%s1] sm:$0xff]
  %v31 = vld [vmem:[%s1 + $0x8] sm:$0xff]
  %v32 = vld [vmem:[%s1 + $0x10] sm:$0xff]
  %v33 = vld [vmem:[%s1 + $0x18] sm:$0xff]
  %v34 = vld [vmem:[%s1 + $0x20] sm:$0xff]
  %v35 = vld [vmem:[%s1 + $0x28] sm:$0xff]
  %v36 = vld [vmem:[%s1 + $0x30] sm:$0xff]
  %v37 = vld [vmem:[%s1 + $0x38] sm:$0xff]
  %v38 = vld [vmem:[%s1 + $0x40] sm:$0xff]
  %v39 = vld [vmem:[%s1 + $0x48] sm:$0xff]
  %v40 = vld [vmem:[%s1 + $0x50] sm:$0xff]
  %v41 = vld [vmem:[%s1 + $0x58] sm:$0xff]
  %v42 = vld [vmem:[%s1 + $0x60] sm:$0xff]
  %v43 = vld [vmem:[%s1 + $0x68] sm:$0xff]
  %v44 = vld [vmem:[%s1 + $0x70] sm:$0xff]
  %v45 = vld [vmem:[%s1 + $0x78] sm:$0xff]
  %v46 = vmul.f32 %v14, %v30
  %v47 = vmul.f32 %v15, %v31
  %v48 = vmul.f32 %v16, %v32
  %v49 = vmul.f32 %v17, %v33
  %v50 = vmul.f32 %v18, %v34
  %v51 = vmul.f32 %v19, %v35
  %v52 = vmul.f32 %v20, %v36
  %v53 = vmul.f32 %v21, %v37
  %v54 = vmul.f32 %v22, %v38
  %v55 = vmul.f32 %v23, %v39
  %v56 = vmul.f32 %v24, %v40
  %v57 = vmul.f32 %v25, %v41
  %v58 = vmul.f32 %v26, %v42
  %v59 = vmul.f32 %v27, %v43
  %v60 = vmul.f32 %v28, %v44
  %v61 = vmul.f32 %v29, %v45
  %vm62 = vcmask 261120
  %v63 = vsel %vm62, %v46, 0.0
  %64 = vadd.xlane.f32.xlu0 %v63
  %v65 = vpop.xlane.xlu0 %64
  %v66 = vsel %vm62, %v47, 0.0
  %67 = vadd.xlane.f32.xlu0 %v66
  %v68 = vpop.xlane.xlu0 %67
  %v69 = vsel %vm62, %v48, 0.0
  %70 = vadd.xlane.f32.xlu0 %v69
  %v71 = vpop.xlane.xlu0 %70
  %v72 = vsel %vm62, %v49, 0.0
  %73 = vadd.xlane.f32.xlu0 %v72
  %v74 = vpop.xlane.xlu0 %73
  %v75 = vsel %vm62, %v50, 0.0
  %76 = vadd.xlane.f32.xlu0 %v75
  %v77 = vpop.xlane.xlu0 %76
  %v78 = vsel %vm62, %v51, 0.0
  %79 = vadd.xlane.f32.xlu0 %v78
  %v80 = vpop.xlane.xlu0 %79
  %v81 = vsel %vm62, %v52, 0.0
  %82 = vadd.xlane.f32.xlu0 %v81
  %v83 = vpop.xlane.xlu0 %82
  %v84 = vsel %vm62, %v53, 0.0
  %85 = vadd.xlane.f32.xlu0 %v84
  %v86 = vpop.xlane.xlu0 %85
  %v87 = vsel %vm62, %v54, 0.0
  %88 = vadd.xlane.f32.xlu0 %v87
  %v89 = vpop.xlane.xlu0 %88
  %v90 = vsel %vm62, %v55, 0.0
  %91 = vadd.xlane.f32.xlu0 %v90
  %v92 = vpop.xlane.xlu0 %91
  %v93 = vsel %vm62, %v56, 0.0
  %94 = vadd.xlane.f32.xlu0 %v93
  %v95 = vpop.xlane.xlu0 %94
  %v96 = vsel %vm62, %v57, 0.0
  %97 = vadd.xlane.f32.xlu0 %v96
  %v98 = vpop.xlane.xlu0 %97
  %v99 = vsel %vm62, %v58, 0.0
  %100 = vadd.xlane.f32.xlu0 %v99
  %v101 = vpop.xlane.xlu0 %100
  %v102 = vsel %vm62, %v59, 0.0
  %103 = vadd.xlane.f32.xlu0 %v102
  %v104 = vpop.xlane.xlu0 %103
  %v105 = vsel %vm62, %v60, 0.0
  %106 = vadd.xlane.f32.xlu0 %v105
  %v107 = vpop.xlane.xlu0 %106
  %v108 = vsel %vm62, %v61, 0.0
  %109 = vadd.xlane.f32.xlu0 %v108
  %v110 = vpop.xlane.xlu0 %109
  %v111 = vld [vmem:[%s2] sm:$0xff]
  %v112 = vld [vmem:[%s2 + $0x8] sm:$0xff]
  %v113 = vld [vmem:[%s2 + $0x10] sm:$0xff]
  %v114 = vld [vmem:[%s2 + $0x18] sm:$0xff]
  %v115 = vld [vmem:[%s2 + $0x20] sm:$0xff]
  %v116 = vld [vmem:[%s2 + $0x28] sm:$0xff]
  %v117 = vld [vmem:[%s2 + $0x30] sm:$0xff]
  %v118 = vld [vmem:[%s2 + $0x38] sm:$0xff]
  %v119 = vld [vmem:[%s2 + $0x40] sm:$0xff]
  %v120 = vld [vmem:[%s2 + $0x48] sm:$0xff]
  %v121 = vld [vmem:[%s2 + $0x50] sm:$0xff]
  %v122 = vld [vmem:[%s2 + $0x58] sm:$0xff]
  %v123 = vld [vmem:[%s2 + $0x60] sm:$0xff]
  %v124 = vld [vmem:[%s2 + $0x68] sm:$0xff]
  %v125 = vld [vmem:[%s2 + $0x70] sm:$0xff]
  %v126 = vld [vmem:[%s2 + $0x78] sm:$0xff]
  %v127 = vadd.f32 %v65, %v111
  %v128 = vadd.f32 %v68, %v112
  %v129 = vadd.f32 %v71, %v113
  %v130 = vadd.f32 %v74, %v114
  %v131 = vadd.f32 %v77, %v115
  %v132 = vadd.f32 %v80, %v116
  %v133 = vadd.f32 %v83, %v117
  %v134 = vadd.f32 %v86, %v118
  %v135 = vadd.f32 %v89, %v119
  %v136 = vadd.f32 %v92, %v120
  %v137 = vadd.f32 %v95, %v121
  %v138 = vadd.f32 %v98, %v122
  %v139 = vadd.f32 %v101, %v123
  %v140 = vadd.f32 %v104, %v124
  %v141 = vadd.f32 %v107, %v125
  %v142 = vadd.f32 %v110, %v126
  %vm143 = vcmask 7168
  %144 = vst.msk [vmem:[%s3] sm:$0xff] %vm143, %v127
  %145 = vst.msk [vmem:[%s3 + $0x8] sm:$0xff] %vm143, %v128
  %146 = vst.msk [vmem:[%s3 + $0x10] sm:$0xff] %vm143, %v129
  %147 = vst.msk [vmem:[%s3 + $0x18] sm:$0xff] %vm143, %v130
  %148 = vst.msk [vmem:[%s3 + $0x20] sm:$0xff] %vm143, %v131
  %149 = vst.msk [vmem:[%s3 + $0x28] sm:$0xff] %vm143, %v132
  %150 = vst.msk [vmem:[%s3 + $0x30] sm:$0xff] %vm143, %v133
  %151 = vst.msk [vmem:[%s3 + $0x38] sm:$0xff] %vm143, %v134
  %152 = vst.msk [vmem:[%s3 + $0x40] sm:$0xff] %vm143, %v135
  %153 = vst.msk [vmem:[%s3 + $0x48] sm:$0xff] %vm143, %v136
  %154 = vst.msk [vmem:[%s3 + $0x50] sm:$0xff] %vm143, %v137
  %155 = vst.msk [vmem:[%s3 + $0x58] sm:$0xff] %vm143, %v138
  %156 = vst.msk [vmem:[%s3 + $0x60] sm:$0xff] %vm143, %v139
  %157 = vst.msk [vmem:[%s3 + $0x68] sm:$0xff] %vm143, %v140
  %158 = vst.msk [vmem:[%s3 + $0x70] sm:$0xff] %vm143, %v141
  %159 = vst.msk [vmem:[%s3 + $0x78] sm:$0xff] %vm143, %v142
  // Predicated region
  $region14: #{tpu_custom_call.1} parent=0 // pred_check
    _
  $region15: #{tpu_custom_call.1} parent=0 // pred_check_branch
    %161 = sbr.rel (0) target = $region17
  $region16: #{tpu_custom_call.1} parent=0 // pred_region
    _
  $region17: #{tpu_custom_call.1} parent=0 // pred_fallthru
    _
  // Predicated region
  $region18: #{tpu_custom_call.1} parent=0 // pred_check
    _
  $region19: #{tpu_custom_call.1} parent=0 // pred_check_branch
    %163 = sbr.rel (0) target = $region21
  $region20: #{tpu_custom_call.1} parent=0 // pred_region
    _
  $region21: #{tpu_custom_call.1} parent=0 // pred_fallthru
    _

</llo_original>
